<compile_context>
chip_gen: v7x
topology: tpu7x:2x2x1
jax: 0.10.0
libtpu: 0.0.40
codegen_flags: <defaults>
</compile_context>

<pallas_src>
import jax
import jax.numpy as jnp
from jax import lax
from jax.experimental import pallas as pl
from jax.experimental.pallas import tpu as pltpu

_C_PAD = 128  # lane-dense padded class dimension


def _vid_encoder_kernel(x_ref, w_enc_ref, w_gw_ref, w_proj_ref, o_ref,
                        m_ref, l_ref, acc_ref):
    # x_ref:      (bb, tt, F)   batch x sequence tile
    # w_enc_ref:  (F, D)        TE stand-in projection (grid-invariant)
    # w_gw_ref:   (1, D)        PredHead.get_weight stored as a row (grid-invariant)
    # w_proj_ref: (D, C_pad)    PredHead.proj, classes zero-padded to 128 lanes
    # o_ref:      (bb, C_pad)   resident across the T grid axis
    # m/l/acc:    online-softmax pooling accumulators (VMEM scratch)
    t_idx = pl.program_id(1)

    @pl.when(t_idx == 0)
    def _():
        m_ref[...] = jnp.full_like(m_ref, -jnp.inf)
        l_ref[...] = jnp.zeros_like(l_ref)
        acc_ref[...] = jnp.zeros_like(acc_ref)

    # --- TE stand-in: batched (bb, tt, F) @ (F, D) on the MXU ----------------
    # dot_general with a contracting dim avoids the reshape->(bb*tt,F)->reshape
    # relayout copies in VMEM.
    feat = lax.dot_general(
        x_ref[...], w_enc_ref[...],
        dimension_numbers=(((2,), (0,)), ((), ())),
        preferred_element_type=jnp.float32)                         # (bb, tt, D)

    # --- PredHead.get_weight (D -> 1): VPU broadcast-mul + lane reduce -------
    logits = jnp.sum(feat * w_gw_ref[...], axis=-1)                 # (bb, tt)

    # --- Online softmax-weighted pooling over the sequence axis --------------
    m_prev = m_ref[...]                                             # (bb, 1)
    m_new = jnp.maximum(m_prev, jnp.max(logits, axis=-1, keepdims=True))
    alpha = jnp.exp(m_prev - m_new)                                 # (bb, 1)
    p = jnp.exp(logits - m_new)                                     # (bb, tt)
    l_ref[...] = alpha * l_ref[...] + jnp.sum(p, axis=-1, keepdims=True)
    acc_ref[...] = alpha * acc_ref[...] + jnp.sum(
        jnp.expand_dims(p, -1) * feat, axis=1)                      # (bb, D)
    m_ref[...] = m_new

    @pl.when(t_idx == pl.num_programs(1) - 1)
    def _():
        # Exact divide: the denominator is only (bb, 1); the approximate EUP
        # reciprocal saves nothing here and costs ~1e-3 relative error.
        rep = acc_ref[...] / l_ref[...]                             # (bb, D)
        out = jnp.dot(rep, w_proj_ref[...],
                      preferred_element_type=jnp.float32)           # (bb, C_pad)
        o_ref[...] = out.astype(o_ref.dtype)


def _vmem_capacity_bytes():
    """Per-generation physical VMEM (v5e/v6e 128 MiB, v7x 64 MiB); falls back
    to the conservative v7x-sized value if the query is unavailable."""
    try:
        info = pltpu.get_tpu_info()
        cap = int(getattr(info, "vmem_capacity_bytes", 0) or 0)
        if cap > 0:
            return cap
    except Exception:
        pass
    return 64 * 1024 * 1024


def _tile_candidates(n):
    """Divisors of n that are multiples of 8, plus n itself (largest first).
    Every candidate divides n exactly -> no ragged tails ever dropped."""
    cands = [d for d in range(8, n + 1, 8) if n % d == 0]
    if n not in cands:
        cands.append(n)
    return sorted(set(cands), reverse=True)


def _pick_tiles(B, T, F, D, vmem_cap):
    """Byte-based tile sizing: largest legal (bb, tt) whose per-step working
    set (double-buffered x tile + feat temps + accumulators + single-buffered
    weights + resident output) fits a fraction of the chip's VMEM."""
    itm = 4  # f32 bytes
    w_bytes = (F * D + D + D * _C_PAD) * itm          # single-buffered weights

    def step_bytes(bb, tt):
        x_tile = 2 * bb * tt * F * itm                # double-buffered input
        feat_ws = 3 * bb * tt * D * itm               # feat + elementwise temps
        scratch = (bb * D + 2 * bb) * itm             # m / l / acc accumulators
        out_tile = 2 * bb * _C_PAD * itm              # resident output block
        return x_tile + feat_ws + scratch + out_tile + w_bytes

    budget = int(0.6 * vmem_cap)

    bb_cands = _tile_candidates(B)
    # Prefer >= 2 batch grid steps so dimension_semantics=("parallel", ...) can
    # shard across v7x's two TensorCores (negligible effect on 1-TC v5e/v6e).
    if B >= 16:
        halved = [c for c in bb_cands if c <= B // 2]
        if halved:
            bb_cands = halved
    tt_cands = _tile_candidates(T)

    for bb in bb_cands:
        for tt in tt_cands:
            if step_bytes(bb, tt) <= budget:
                return bb, tt, step_bytes(bb, tt)
    bb, tt = bb_cands[-1], tt_cands[-1]               # smallest legal fallback
    return bb, tt, step_bytes(bb, tt)


def vid_encoder_forward(x, w_enc, w_gw, w_proj):
    B, T, F = x.shape
    D = w_enc.shape[1]
    C = w_proj.shape[1]

    # Wrapper-side layout plumbing (no compute hoisting):
    w_gw_row = w_gw.reshape(1, D)                           # (D, 1) -> (1, D)
    w_proj_pad = jnp.pad(w_proj, ((0, 0), (0, _C_PAD - C)))  # zero class padding

    vmem_cap = _vmem_capacity_bytes()
    bb, tt, vmem_need = _pick_tiles(B, T, F, D, vmem_cap)
    assert B % bb == 0 and T % tt == 0, (B, bb, T, tt)
    grid = (B // bb, T // tt)                 # reduction (T) axis last

    # Advisory cost estimate so XLA schedules this call sensibly.
    flops = 2 * B * T * F * D + 4 * B * T * D + 2 * B * D * _C_PAD
    bytes_accessed = 4 * (B * T * F + F * D + D + D * _C_PAD + B * _C_PAD)
    cost = pl.CostEstimate(flops=flops,
                           transcendentals=B * T + B * grid[1],
                           bytes_accessed=bytes_accessed)

    # Scoped VMEM limit tied to the actual need + headroom, capped per-gen.
    vmem_limit = int(min(max(2 * vmem_need, 4 * 1024 * 1024),
                         (vmem_cap * 3) // 4))

    weight_mode = pl.Buffered(1)              # grid-invariant: no double buffer

    out = pl.pallas_call(
        _vid_encoder_kernel,
        out_shape=jax.ShapeDtypeStruct((B, _C_PAD), jnp.float32),
        grid_spec=pltpu.PrefetchScalarGridSpec(
            num_scalar_prefetch=0,
            grid=grid,
            in_specs=[
                pl.BlockSpec((bb, tt, F), lambda i, t: (i, t, 0)),
                pl.BlockSpec((F, D), lambda i, t: (0, 0),
                             pipeline_mode=weight_mode),
                pl.BlockSpec((1, D), lambda i, t: (0, 0),
                             pipeline_mode=weight_mode),
                pl.BlockSpec((D, _C_PAD), lambda i, t: (0, 0),
                             pipeline_mode=weight_mode),
            ],
            out_specs=pl.BlockSpec((bb, _C_PAD), lambda i, t: (i, 0)),
            scratch_shapes=[
                pltpu.VMEM((bb, 1), jnp.float32),   # m: running max
                pltpu.VMEM((bb, 1), jnp.float32),   # l: running denominator
                pltpu.VMEM((bb, D), jnp.float32),   # acc: running numerator
            ],
        ),
        compiler_params=pltpu.CompilerParams(
            dimension_semantics=("parallel", "arbitrary"),
            vmem_limit_bytes=vmem_limit,
        ),
        cost_estimate=cost,
    )(x, w_enc, w_gw_row, w_proj_pad)
    return out[:, :C]


def vid_encoder_reference(x, w_enc, w_gw, w_proj):
    hi = jax.lax.Precision.HIGHEST
    feat = jnp.einsum("btf,fd->btd", x, w_enc, precision=hi)
    logits = jnp.einsum("btd,do->bto", feat, w_gw, precision=hi)  # (B, T, 1)
    w = jax.nn.softmax(logits, axis=-2)
    rep = jnp.sum(w * feat, axis=-2)                              # (B, D)
    return jnp.einsum("bd,dc->bc", rep, w_proj, precision=hi)


if __name__ == "__main__":
    # Small shapes consistent with the module's forward.
    B, T, F = 2, 8, 16        # batch, sequence length, num_features
    D, C = 32, 6              # args.d_model, num_classes

    key = jax.random.PRNGKey(0)
    kx, k1, k2, k3 = jax.random.split(key, 4)
    x = jax.random.normal(kx, (B, T, F), dtype=jnp.float32)
    w_enc = jax.random.normal(k1, (F, D), dtype=jnp.float32) * (1.0 / F ** 0.5)
    w_gw = jax.random.normal(k2, (D, 1), dtype=jnp.float32) * (1.0 / D ** 0.5)
    w_proj = jax.random.normal(k3, (D, C), dtype=jnp.float32) * (1.0 / D ** 0.5)

    out = vid_encoder_forward(x, w_enc, w_gw, w_proj)
    out = jax.block_until_ready(out)

    ref = vid_encoder_reference(x, w_enc, w_gw, w_proj)
    assert out.shape == (B, C), out.shape
    # Exact divide for the softmax denominator -> much tighter agreement than
    # the previous approx-reciprocal version (all math is f32).
    assert jnp.allclose(out, ref, atol=1e-3, rtol=1e-3), (out, ref)
    print("KERNEL_OK")
</pallas_src>

<mosaic_0001>
module attributes {stable_mosaic.version = 11 : i64} {
  func.func @_vid_encoder_kernel(%arg0: i32, %arg1: i32, %arg2: memref<2x8x16xf32, #tpu.memory_space<vmem>>, %arg3: memref<16x32xf32, #tpu.memory_space<vmem>>, %arg4: memref<1x32xf32, #tpu.memory_space<vmem>>, %arg5: memref<32x128xf32, #tpu.memory_space<vmem>>, %arg6: memref<2x128xf32, #tpu.memory_space<vmem>>, %arg7: memref<2x1xf32, #tpu.memory_space<vmem>>, %arg8: memref<2x1xf32, #tpu.memory_space<vmem>>, %arg9: memref<2x32xf32, #tpu.memory_space<vmem>>) attributes {dimension_semantics = [#tpu.dimension_semantics<parallel>, #tpu.dimension_semantics<arbitrary>], iteration_bounds = array<i64: 1, 1>, scalar_prefetch = 0 : i64, scratch_operands = 3 : i64, tpu.core_type = #tpu.core_type<tc>, window_params = [{transform_indices = @transform_0, window_bounds = array<i64: 2, 8, 16>}, {pipeline_mode = #tpu.pipeline_mode<synchronous>, transform_indices = @transform_1, window_bounds = array<i64: 16, 32>}, {pipeline_mode = #tpu.pipeline_mode<synchronous>, transform_indices = @transform_2, window_bounds = array<i64: 1, 32>}, {pipeline_mode = #tpu.pipeline_mode<synchronous>, transform_indices = @transform_3, window_bounds = array<i64: 32, 128>}, {transform_indices = @transform_4, window_bounds = array<i64: 2, 128>}]} {
    %c0_i32 = arith.constant 0 : i32
    %0 = arith.cmpi eq, %arg1, %c0_i32 : i32
    %1 = arith.extui %0 : i1 to i32
    %c0_i32_0 = arith.constant 0 : i32
    %2 = arith.cmpi ne, %1, %c0_i32_0 : i32
    scf.if %2 {
      %cst_25 = arith.constant 0xFF800000 : f32
      %39 = vector.broadcast %cst_25 : f32 to vector<2x1xf32>
      %c0_26 = arith.constant 0 : index
      %c0_27 = arith.constant 0 : index
      %40 = vector.load %arg7[%c0_26, %c0_27] : memref<2x1xf32, #tpu.memory_space<vmem>>, vector<2x1xf32>
      tpu.vector_store %arg7[%c0_26, %c0_27], %39 {strides = array<i32>} : memref<2x1xf32, #tpu.memory_space<vmem>>, vector<2x1xf32>,
      %cst_28 = arith.constant 0.000000e+00 : f32
      %41 = vector.broadcast %cst_28 : f32 to vector<2x1xf32>
      %c0_29 = arith.constant 0 : index
      %c0_30 = arith.constant 0 : index
      %42 = vector.load %arg8[%c0_29, %c0_30] : memref<2x1xf32, #tpu.memory_space<vmem>>, vector<2x1xf32>
      tpu.vector_store %arg8[%c0_29, %c0_30], %41 {strides = array<i32>} : memref<2x1xf32, #tpu.memory_space<vmem>>, vector<2x1xf32>,
      %cst_31 = arith.constant 0.000000e+00 : f32
      %43 = vector.broadcast %cst_31 : f32 to vector<2x32xf32>
      %c0_32 = arith.constant 0 : index
      %c0_33 = arith.constant 0 : index
      %44 = vector.load %arg9[%c0_32, %c0_33] : memref<2x32xf32, #tpu.memory_space<vmem>>, vector<2x32xf32>
      tpu.vector_store %arg9[%c0_32, %c0_33], %43 {strides = array<i32>} : memref<2x32xf32, #tpu.memory_space<vmem>>, vector<2x32xf32>,
    } else {
    }
    %c0 = arith.constant 0 : index
    %c0_1 = arith.constant 0 : index
    %c0_2 = arith.constant 0 : index
    %3 = vector.load %arg2[%c0, %c0_1, %c0_2] : memref<2x8x16xf32, #tpu.memory_space<vmem>>, vector<2x8x16xf32>
    %c0_3 = arith.constant 0 : index
    %c0_4 = arith.constant 0 : index
    %4 = vector.load %arg3[%c0_3, %c0_4] : memref<16x32xf32, #tpu.memory_space<vmem>>, vector<16x32xf32>
    %cst = arith.constant dense<0.000000e+00> : vector<2x8x32xf32>
    %5 = tpu.matmul %3, %4, %cst {dimension_numbers = #tpu.dot_dimension_numbers<[2], [0], [0, 1], [1], [0, 0, 0, 1, 1, 1], [], []>} : vector<2x8x16xf32>, vector<16x32xf32>, vector<2x8x32xf32> -> vector<2x8x32xf32>
    %c0_5 = arith.constant 0 : index
    %c0_6 = arith.constant 0 : index
    %6 = vector.load %arg4[%c0_5, %c0_6] : memref<1x32xf32, #tpu.memory_space<vmem>>, vector<1x32xf32>
    %7 = vector.shape_cast %6 : vector<1x32xf32> to vector<1x1x32xf32>
    %8 = vector.broadcast %7 : vector<1x1x32xf32> to vector<2x8x32xf32>
    %9 = arith.mulf %5, %8 : vector<2x8x32xf32>
    %cst_7 = arith.constant dense<0.000000e+00> : vector<2x8xf32>
    %10 = vector.multi_reduction <add>, %9, %cst_7 [2] : vector<2x8x32xf32> to vector<2x8xf32>
    %c0_8 = arith.constant 0 : index
    %c0_9 = arith.constant 0 : index
    %11 = vector.load %arg7[%c0_8, %c0_9] : memref<2x1xf32, #tpu.memory_space<vmem>>, vector<2x1xf32>
    %cst_10 = arith.constant dense<0xFF800000> : vector<2xf32>
    %12 = vector.multi_reduction <maximumf>, %10, %cst_10 [1] : vector<2x8xf32> to vector<2xf32>
    %13 = vector.shape_cast %12 : vector<2xf32> to vector<2x1xf32>
    %14 = arith.maximumf %11, %13 : vector<2x1xf32>
    %15 = arith.subf %11, %14 : vector<2x1xf32>
    %16 = math.exp %15 : vector<2x1xf32>
    %17 = vector.broadcast %14 : vector<2x1xf32> to vector<2x8xf32>
    %18 = arith.subf %10, %17 : vector<2x8xf32>
    %19 = math.exp %18 : vector<2x8xf32>
    %c0_11 = arith.constant 0 : index
    %c0_12 = arith.constant 0 : index
    %20 = vector.load %arg8[%c0_11, %c0_12] : memref<2x1xf32, #tpu.memory_space<vmem>>, vector<2x1xf32>
    %21 = arith.mulf %16, %20 : vector<2x1xf32>
    %cst_13 = arith.constant dense<0.000000e+00> : vector<2xf32>
    %22 = vector.multi_reduction <add>, %19, %cst_13 [1] : vector<2x8xf32> to vector<2xf32>
    %23 = vector.shape_cast %22 : vector<2xf32> to vector<2x1xf32>
    %24 = arith.addf %21, %23 : vector<2x1xf32>
    %c0_14 = arith.constant 0 : index
    %c0_15 = arith.constant 0 : index
    %25 = vector.load %arg8[%c0_14, %c0_15] : memref<2x1xf32, #tpu.memory_space<vmem>>, vector<2x1xf32>
    tpu.vector_store %arg8[%c0_14, %c0_15], %24 {strides = array<i32>} : memref<2x1xf32, #tpu.memory_space<vmem>>, vector<2x1xf32>,
    %c0_16 = arith.constant 0 : index
    %c0_17 = arith.constant 0 : index
    %26 = vector.load %arg9[%c0_16, %c0_17] : memref<2x32xf32, #tpu.memory_space<vmem>>, vector<2x32xf32>
    %27 = vector.broadcast %16 : vector<2x1xf32> to vector<2x32xf32>
    %28 = arith.mulf %27, %26 : vector<2x32xf32>
    %29 = vector.shape_cast %19 : vector<2x8xf32> to vector<2x8x1xf32>
    %30 = vector.broadcast %29 : vector<2x8x1xf32> to vector<2x8x32xf32>
    %31 = arith.mulf %30, %5 : vector<2x8x32xf32>
    %cst_18 = arith.constant dense<0.000000e+00> : vector<2x32xf32>
    %32 = vector.multi_reduction <add>, %31, %cst_18 [1] : vector<2x8x32xf32> to vector<2x32xf32>
    %33 = arith.addf %28, %32 : vector<2x32xf32>
    %c0_19 = arith.constant 0 : index
    %c0_20 = arith.constant 0 : index
    %34 = vector.load %arg9[%c0_19, %c0_20] : memref<2x32xf32, #tpu.memory_space<vmem>>, vector<2x32xf32>
    tpu.vector_store %arg9[%c0_19, %c0_20], %33 {strides = array<i32>} : memref<2x32xf32, #tpu.memory_space<vmem>>, vector<2x32xf32>,
    %c0_21 = arith.constant 0 : index
    %c0_22 = arith.constant 0 : index
    %35 = vector.load %arg7[%c0_21, %c0_22] : memref<2x1xf32, #tpu.memory_space<vmem>>, vector<2x1xf32>
    tpu.vector_store %arg7[%c0_21, %c0_22], %14 {strides = array<i32>} : memref<2x1xf32, #tpu.memory_space<vmem>>, vector<2x1xf32>,
    %c0_i32_23 = arith.constant 0 : i32
    %36 = arith.cmpi eq, %arg1, %c0_i32_23 : i32
    %37 = arith.extui %36 : i1 to i32
    %c0_i32_24 = arith.constant 0 : i32
    %38 = arith.cmpi ne, %37, %c0_i32_24 : i32
    scf.if %38 {
      %c0_25 = arith.constant 0 : index
      %c0_26 = arith.constant 0 : index
      %39 = vector.load %arg9[%c0_25, %c0_26] : memref<2x32xf32, #tpu.memory_space<vmem>>, vector<2x32xf32>
      %c0_27 = arith.constant 0 : index
      %c0_28 = arith.constant 0 : index
      %40 = vector.load %arg8[%c0_27, %c0_28] : memref<2x1xf32, #tpu.memory_space<vmem>>, vector<2x1xf32>
      %41 = vector.broadcast %40 : vector<2x1xf32> to vector<2x32xf32>
      %42 = arith.divf %39, %41 : vector<2x32xf32>
      %c0_29 = arith.constant 0 : index
      %c0_30 = arith.constant 0 : index
      %43 = vector.load %arg5[%c0_29, %c0_30] : memref<32x128xf32, #tpu.memory_space<vmem>>, vector<32x128xf32>
      %cst_31 = arith.constant dense<0.000000e+00> : vector<2x128xf32>
      %44 = tpu.matmul %42, %43, %cst_31 {dimension_numbers = #tpu.dot_dimension_numbers<[1], [0], [0], [1], [0, 0, 1, 1], [], []>} : vector<2x32xf32>, vector<32x128xf32>, vector<2x128xf32> -> vector<2x128xf32>
      %c0_32 = arith.constant 0 : index
      %c0_33 = arith.constant 0 : index
      %45 = vector.load %arg6[%c0_32, %c0_33] : memref<2x128xf32, #tpu.memory_space<vmem>>, vector<2x128xf32>
      tpu.vector_store %arg6[%c0_32, %c0_33], %44 {strides = array<i32>} : memref<2x128xf32, #tpu.memory_space<vmem>>, vector<2x128xf32>,
    } else {
    }
    return
  }
  func.func @transform_0(%arg0: i32, %arg1: i32) -> (i32, i32, i32) {
    %c0_i32 = arith.constant 0 : i32
    %c0_i32_0 = arith.constant 0 : i32
    return %arg0, %arg1, %c0_i32 : i32, i32, i32
  }
  func.func @transform_1(%arg0: i32, %arg1: i32) -> (i32, i32) {
    %c0_i32 = arith.constant 0 : i32
    %c0_i32_0 = arith.constant 0 : i32
    %c0_i32_1 = arith.constant 0 : i32
    return %c0_i32, %c0_i32_0 : i32, i32
  }
  func.func @transform_2(%arg0: i32, %arg1: i32) -> (i32, i32) {
    %c0_i32 = arith.constant 0 : i32
    %c0_i32_0 = arith.constant 0 : i32
    %c0_i32_1 = arith.constant 0 : i32
    return %c0_i32, %c0_i32_0 : i32, i32
  }
  func.func @transform_3(%arg0: i32, %arg1: i32) -> (i32, i32) {
    %c0_i32 = arith.constant 0 : i32
    %c0_i32_0 = arith.constant 0 : i32
    %c0_i32_1 = arith.constant 0 : i32
    return %c0_i32, %c0_i32_0 : i32, i32
  }
  func.func @transform_4(%arg0: i32, %arg1: i32) -> (i32, i32) {
    %c0_i32 = arith.constant 0 : i32
    %c0_i32_0 = arith.constant 0 : i32
    return %arg0, %c0_i32 : i32, i32
  }
}

</mosaic_0001>

<llo_original>
// kernel: tpu_custom_call.1
$region0: #{tpu_custom_call.1}
  #allocation0 [shape = 'u32[]', space=smem, size = 0x4, offset = 0x4, fixed_abs, tag = 'smem constant byte address 0x4 - core index']
  #allocation1 [shape = 'u32[144,128]{1,0:T(1,128)}', space=vmem, size = 0x12000, scoped, tag = 'internal scratch']
  #allocation2 [shape = 'f32[2,1]{1,0:T(2,128)}', space=vmem, size = 0x400, scoped, tag = 'scratch operand']
  #allocation3 [shape = 'f32[2,1]{1,0:T(2,128)}', space=vmem, size = 0x400, scoped, tag = 'scratch operand']
  #allocation4 [shape = 'f32[2,32]{1,0:T(2,128)}', space=vmem, size = 0x400, scoped, tag = 'scratch operand']
  %s0 = inlined_call_operand.hbm [shape: f32[2,8,16], index: 0, kind: input, shape index: {}]
  %s1 = inlined_call_operand.hbm [shape: f32[16,32], index: 1, kind: input, shape index: {}]
  %s2 = inlined_call_operand.vmem [shape: f32[1,32], index: 2, kind: input, shape index: {}]
  %s3 = inlined_call_operand.hbm [shape: f32[32,128], index: 3, kind: input, shape index: {}]
  %s4 = inlined_call_operand.hbm [shape: f32[2,128], index: 4, kind: output, shape index: {}]
  %s5 = sld [smem:[#allocation0]]
  $region46: #{tpu_custom_call.1} parent=0
    _
  %s7 = ssub.s32 1, %s5
  %s8 = scalar_select 0, %s7, %s5
  $region1: #{tpu_custom_call.1} parent=0
    #allocation5 [shape = 'u8[8192]{0}', space=vmem, size = 0x2000, scoped, tag = 'input window, operand 0, single buffered']
    #allocation6 [shape = 's32[1]{0}', space=sflag, size = 0x4, scoped, tag = 'scoped memory for tpu_custom_call.1']
    #allocation7 [shape = 's32[1]{0}', space=sflag, size = 0x4, scoped, tag = 'scoped memory for tpu_custom_call.1']
    #allocation8 [shape = 'u8[8192]{0}', space=vmem, size = 0x2000, scoped, tag = 'input window, operand 1, single buffered']
    #allocation9 [shape = 's32[1]{0}', space=sflag, size = 0x4, scoped, tag = 'scoped memory for tpu_custom_call.1']
    #allocation10 [shape = 'u8[16384]{0}', space=vmem, size = 0x4000, scoped, tag = 'input window, operand 3, single buffered']
    #allocation11 [shape = 'u8[1024]{0}', space=vmem, size = 0x400, scoped, tag = 'output window, operand 0, single buffered']
    %9 = vsyncpa [#allocation6], 0
    %10 = vsyncpa [#allocation9], 0
    %11 = vsyncpa [#allocation7], 0
    // Predicated region
    $region2: #{tpu_custom_call.1} parent=1 // pred_check
      _
    $region3: #{tpu_custom_call.1} parent=1 // pred_check_branch
      %13 = sbr.rel (0) target = $region5
    $region4: #{tpu_custom_call.1} parent=1 // pred_region
      %s15 = ssub.s32 256, 256
      %16 = vsyncadd [#allocation6], %s15
      %s17 = sshll.u32 [#allocation5], 4
      %s18 = int_to_ptr.vmem [resolvable:$true] %s17
      %23 = dma.hbm_to_vmem [thread:$0]  %s0, 256, %s18, [#allocation6], 128, 128, 8
    $region5: #{tpu_custom_call.1} parent=1 // pred_fallthru
      _
    // Predicated region
    $region6: #{tpu_custom_call.1} parent=1 // pred_check
      _
    $region7: #{tpu_custom_call.1} parent=1 // pred_check_branch
      %25 = sbr.rel (0) target = $region9
    $region8: #{tpu_custom_call.1} parent=1 // pred_region
      %s27 = ssub.s32 256, 256
      %28 = vsyncadd [#allocation9], %s27
      %s29 = sshll.u32 [#allocation8], 4
      %s30 = int_to_ptr.vmem [resolvable:$true] %s29
      %35 = dma.hbm_to_vmem [thread:$0]  %s1, 256, %s30, [#allocation9], 128, 128, 8
    $region9: #{tpu_custom_call.1} parent=1 // pred_fallthru
      _
    // Predicated region
    $region10: #{tpu_custom_call.1} parent=1 // pred_check
      _
    $region11: #{tpu_custom_call.1} parent=1 // pred_check_branch
      %37 = sbr.rel (0) target = $region13
    $region12: #{tpu_custom_call.1} parent=1 // pred_region
      _
    $region13: #{tpu_custom_call.1} parent=1 // pred_fallthru
      _
    // Predicated region
    $region14: #{tpu_custom_call.1} parent=1 // pred_check
      _
    $region15: #{tpu_custom_call.1} parent=1 // pred_check_branch
      %39 = sbr.rel (0) target = $region17
    $region16: #{tpu_custom_call.1} parent=1 // pred_region
      %s41 = ssub.s32 512, 512
      %42 = vsyncadd [#allocation9], %s41
      %s43 = sshll.u32 [#allocation10], 4
      %s44 = int_to_ptr.vmem [resolvable:$true] %s43
      %49 = dma.hbm_to_vmem [thread:$0]  %s3, 512, %s44, [#allocation9], 128, 128, 8
    $region17: #{tpu_custom_call.1} parent=1 // pred_fallthru
      _
    // Predicated region
    $region18: #{tpu_custom_call.1} parent=1 // pred_check
      _
    $region19: #{tpu_custom_call.1} parent=1 // pred_check_branch
      %51 = sbr.rel (0) target = $region21
    $region20: #{tpu_custom_call.1} parent=1 // pred_region
      %52 = dma.done [#allocation6], 256
    $region21: #{tpu_custom_call.1} parent=1 // pred_fallthru
      _
    // Predicated region
    $region22: #{tpu_custom_call.1} parent=1 // pred_check
      _
    $region23: #{tpu_custom_call.1} parent=1 // pred_check_branch
      %54 = sbr.rel (0) target = $region25
    $region24: #{tpu_custom_call.1} parent=1 // pred_region
      %55 = dma.done [#allocation9], 256
    $region25: #{tpu_custom_call.1} parent=1 // pred_fallthru
      _
    // Predicated region
    $region26: #{tpu_custom_call.1} parent=1 // pred_check
      _
    $region27: #{tpu_custom_call.1} parent=1 // pred_check_branch
      %57 = sbr.rel (0) target = $region29
    $region28: #{tpu_custom_call.1} parent=1 // pred_region
      %58 = dma.done [#allocation9], 512
    $region29: #{tpu_custom_call.1} parent=1 // pred_fallthru
      _
    %p59 = scmp.eq.s32.totalorder 0, 0
    // Predicated region
    $region30: #{tpu_custom_call.1} parent=1 // pred_check
      %p60 = pneg %p59
    $region31: #{tpu_custom_call.1} parent=1 // pred_check_branch
      %62 = sbr.rel (%p60) target = $region33
    $region32: #{tpu_custom_call.1} parent=1 // pred_region
      %vm63 = vcmask 1024
      %64 = vst.msk [vmem:[#allocation2] sm:$0x3] %vm63, -inf
      %65 = vst.msk [vmem:[#allocation3] sm:$0x3] %vm63, 0.0
      %vm66 = vcmask 254976
      %67 = vst.msk [vmem:[#allocation4] sm:$0x3] %vm66, 0.0
    $region33: #{tpu_custom_call.1} parent=1 // pred_fallthru
      _
    %v68 = vld [vmem:[#allocation5] sm:$0xff]
    %v69 = vld [vmem:[#allocation5 + $0x8] sm:$0xff]
    %v70 = vld [vmem:[#allocation8] sm:$0xff]
    %v71 = vld [vmem:[#allocation8 + $0x8] sm:$0xff]
    %vm72 = vcmask 130048
    %v74 = vsel %vm72, %v68, 0
    %v77 = vsel %vm72, %v69, 0
    %79 = vmatprep.subr.mxu0 0.0
    %80 = vmatpush1.msra.mxu0 %v70
    %81 = vmatprep.subr.mxu0 0.0
    %82 = vmatpush1.msra.mxu0 %v71
    %83 = vmatprep.subr.mxu0 0.0
    %84 = vmatpush1.msra.mxu0 0.0
    %85 = vmatprep.subr.mxu0 0.0
    %86 = vmatpush1.msra.mxu0 0.0
    %87 = vmatprep.subr.mxu0 0.0
    %88 = vmatpush1.msra.mxu0 0.0
    %89 = vmatprep.subr.mxu0 0.0
    %90 = vmatpush1.msra.mxu0 0.0
    %91 = vmatprep.subr.mxu0 0.0
    %92 = vmatpush1.msra.mxu0 0.0
    %93 = vmatprep.subr.mxu0 0.0
    %94 = vmatpush1.msra.mxu0 0.0
    %95 = vmatprep.subr.mxu0 0.0
    %96 = vmatpush1.msra.mxu0 0.0
    %97 = vmatprep.subr.mxu0 0.0
    %98 = vmatpush1.msra.mxu0 0.0
    %99 = vmatprep.subr.mxu0 0.0
    %100 = vmatpush1.msra.mxu0 0.0
    %101 = vmatprep.subr.mxu0 0.0
    %102 = vmatpush1.msra.mxu0 0.0
    %103 = vmatprep.subr.mxu0 0.0
    %104 = vmatpush1.msra.mxu0 0.0
    %105 = vmatprep.subr.mxu0 0.0
    %106 = vmatpush1.msra.mxu0 0.0
    %107 = vmatprep.subr.mxu0 0.0
    %108 = vmatpush1.msra.mxu0 0.0
    %109 = vmatprep.subr.mxu0 0.0
    %110 = vmatpush1.msra.mxu0 0.0
    %111 = vmatprep.subr.mxu0 0.0
    %112 = vmatpush1.msra.mxu0 0.0
    %113 = vmatprep.subr.mxu0 0.0
    %114 = vmatpush1.msra.mxu0 0.0
    %115 = vmatprep.subr.mxu0 0.0
    %116 = vmatpush1.msra.mxu0 0.0
    %117 = vmatprep.subr.mxu0 0.0
    %118 = vmatpush1.msra.mxu0 0.0
    %119 = vmatprep.subr.mxu0 0.0
    %120 = vmatpush1.msra.mxu0 0.0
    %121 = vmatprep.subr.mxu0 0.0
    %122 = vmatpush1.msra.mxu0 0.0
    %123 = vmatprep.subr.mxu0 0.0
    %124 = vmatpush1.msra.mxu0 0.0
    %125 = vmatprep.subr.mxu0 0.0
    %126 = vmatpush1.msra.mxu0 0.0
    %127 = vmatprep.subr.mxu0 0.0
    %128 = vmatpush1.msra.mxu0 0.0
    %129 = vmatprep.subr.mxu0 0.0
    %130 = vmatpush1.msra.mxu0 0.0
    %131 = vmatprep.subr.mxu0 0.0
    %132 = vmatpush1.msra.mxu0 0.0
    %133 = vmatprep.subr.mxu0 0.0
    %134 = vmatpush1.msra.mxu0 0.0
    %135 = vmatprep.subr.mxu0 0.0
    %136 = vmatpush1.msra.mxu0 0.0
    %137 = vmatprep.subr.mxu0 0.0
    %138 = vmatpush1.msra.mxu0 0.0
    %139 = vmatprep.subr.mxu0 0.0
    %140 = vmatpush1.msra.mxu0 0.0
    %141 = vmatprep.subr.mxu0 0.0
    %142 = vmatpush1.msra.mxu0 0.0
    %143 = vmatprep.mubr.f32.mxu0 0.0
    %144 = vmatmul.mubr.f32.gmra.mrb[0].mxu0 %v74
    %v145 = vpop.f32.mrb[0].mxu0
    %v146 = vadd.f32 0.0, %v145
    %v147 = vpop.f32.mrb[0].mxu0
    %148 = vmatprep.mubr.f32.mxu0 0.0
    %149 = vmatmul.mubr.f32.gmra.mrb[0].mxu0 %v77
    %v150 = vpop.f32.mrb[0].mxu0
    %v151 = vadd.f32 0.0, %v150
    %v152 = vpop.f32.mrb[0].mxu0
    %153 = vdwg.mxu0
    %v154 = vld [vmem:[%s2] sm:$0x1]
    %v156 = vlaneseq
    %v157 = vshrl.u32 %v156, 7
    %v158 = vsub.s32 0, %v157
    %v159 = vrot.slane %v154, %v158
    %v161 = vmul.f32 %v146, %v159
    %v162 = vmul.f32 %v151, %v159
    %vm163 = vcmask 261120
    %v164 = vsel %vm163, %v161, 0.0
    %165 = vadd.xlane.f32.xlu0 %v164
    %v166 = vpop.xlane.xlu0 %165
    %v167 = vsel %vm163, %v162, 0.0
    %168 = vadd.xlane.f32.xlu0 %v167
    %v169 = vpop.xlane.xlu0 %168
    %v170 = vld [vmem:[#allocation2] sm:$0x3]
    %v173 = vlaneseq
    %v174 = vand.u32 %v173, 127
    %v175 = vlaneseq
    %v176 = vshrl.u32 %v175, 7
    %v177 = vsub.s32 %v174, %v176
    %v178 = vrot.slane %v166, %v177
    %v179 = vlaneseq
    %v180 = vshrl.u32 %v179, 7
    %v181 = vsub.s32 %v174, %v180
    %v182 = vrot.slane %v169, %v181
    %vm183 = vcmask 1041409
    %v184 = vsel %vm183, %v182, %v178
    %vm186 = vcmask 58368
    %v187 = vsel %vm186, %v184, -inf
    %188 = vmax.xlane.f32.xlu0 %v187
    %v189 = vpop.xlane.xlu0 %188
    %v190 = vmax.f32 %v170, %v189
    %v191 = vsub.f32 %v170, %v190
    %v192 = vmul.f32 %v191, 1.442695
    %v193 = vpow.pop %v192
    %195 = vset.pattern.permute.xlu0 0
    %196 = vperm.xlu0 %195, %v190
    %v197 = vpop.permute.xlu0 %196
    %v198 = vlaneseq
    %v199 = vshrl.u32 %v198, 7
    %v200 = vsub.s32 0, %v199
    %v201 = vrot.slane %v197, %v200
    %v202 = vlaneseq
    %v203 = vshrl.u32 %v202, 7
    %v204 = vsub.s32 1, %v203
    %v205 = vrot.slane %v197, %v204
    %v208 = vsub.f32 %v166, %v201
    %v209 = vsub.f32 %v169, %v205
    %v210 = vmul.f32 %v208, 1.442695
    %v211 = vpow.pop %v210
    %v212 = vmul.f32 %v209, 1.442695
    %v213 = vpow.pop %v212
    %v214 = vld [vmem:[#allocation3] sm:$0x3]
    %v215 = vmul.f32 %v193, %v214
    %218 = vset.pattern.permute.xlu0 0
    %219 = vperm.xlu0 %218, %v211
    %v220 = vpop.permute.xlu0 %219
    %221 = vset.pattern.permute.xlu0 0
    %222 = vperm.xlu0 %221, %v213
    %v223 = vpop.permute.xlu0 %222
    %v224 = vlaneseq
    %v225 = vshrl.u32 %v224, 7
    %v226 = vsub.s32 %v174, %v225
    %v227 = vrot.slane %v220, %v226
    %v228 = vlaneseq
    %v229 = vshrl.u32 %v228, 7
    %v230 = vsub.s32 %v174, %v229
    %v231 = vrot.slane %v223, %v230
    %v232 = vsel %vm183, %v231, %v227
    %v234 = vsel %vm186, %v232, 0.0
    %235 = vadd.xlane.f32.xlu0 %v234
    %v236 = vpop.xlane.xlu0 %235
    %v237 = vadd.f32 %v215, %v236
    %vm238 = vcmask 1024
    %239 = vst.msk [vmem:[#allocation3] sm:$0x3] %vm238, %v237
    %v240 = vld [vmem:[#allocation4] sm:$0x3]
    %242 = vset.pattern.permute.xlu0 0
    %243 = vperm.xlu0 %242, %v193
    %v244 = vpop.permute.xlu0 %243
    %v246 = vmul.f32 %v244, %v240
    %v249 = vmul.f32 %v220, %v146
    %v250 = vmul.f32 %v223, %v151
    %v251 = vsel %vm163, %v249, 0.0
    %v252 = vrot.slane %v251, 4
    %v253 = vadd.f32 %v251, %v252
    %v254 = vrot.slane %v253, 2
    %v255 = vadd.f32 %v253, %v254
    %v256 = vrot.slane %v255, 1
    %v257 = vadd.f32 %v255, %v256
    %v258 = vsel %vm163, %v250, 0.0
    %v259 = vrot.slane %v258, 4
    %v260 = vadd.f32 %v258, %v259
    %v261 = vrot.slane %v260, 2
    %v262 = vadd.f32 %v260, %v261
    %v263 = vrot.slane %v262, 1
    %v264 = vadd.f32 %v262, %v263
    %v267 = vsel %vm183, %v264, %v257
    %v269 = vadd.f32 %v246, %v267
    %vm270 = vcmask 254976
    %271 = vst.msk [vmem:[#allocation4] sm:$0x3] %vm270, %v269
    %272 = vst.msk [vmem:[#allocation2] sm:$0x3] %vm238, %v190
    // Predicated region
    $region34: #{tpu_custom_call.1} parent=1 // pred_check
      %p273 = pneg %p59
    $region35: #{tpu_custom_call.1} parent=1 // pred_check_branch
      %275 = sbr.rel (%p273) target = $region37
    $region36: #{tpu_custom_call.1} parent=1 // pred_region
      %v276 = vld [vmem:[#allocation4] sm:$0x3]
      %v277 = vld [vmem:[#allocation3] sm:$0x3]
      %279 = vset.pattern.permute.xlu0 0
      %280 = vperm.xlu0 %279, %v277
      %v281 = vpop.permute.xlu0 %280
      %v283 = vrcp.pop %v281
      %v284 = vmul.f32 %v276, %v283
      %v285 = vld [vmem:[#allocation10] sm:$0xff]
      %v286 = vld [vmem:[#allocation10 + $0x8] sm:$0xff]
      %v287 = vld [vmem:[#allocation10 + $0x10] sm:$0xff]
      %v288 = vld [vmem:[#allocation10 + $0x18] sm:$0xff]
      %v290 = vsel %vm163, %v284, 0
      %292 = vmatprep.subr.mxu0 0.0
      %293 = vmatpush1.msra.mxu0 %v285
      %294 = vmatprep.subr.mxu0 0.0
      %295 = vmatpush1.msra.mxu0 %v286
      %296 = vmatprep.subr.mxu0 0.0
      %297 = vmatpush1.msra.mxu0 %v287
      %298 = vmatprep.subr.mxu0 0.0
      %299 = vmatpush1.msra.mxu0 %v288
      %300 = vmatprep.subr.mxu0 0.0
      %301 = vmatpush1.msra.mxu0 0.0
      %302 = vmatprep.subr.mxu0 0.0
      %303 = vmatpush1.msra.mxu0 0.0
      %304 = vmatprep.subr.mxu0 0.0
      %305 = vmatpush1.msra.mxu0 0.0
      %306 = vmatprep.subr.mxu0 0.0
      %307 = vmatpush1.msra.mxu0 0.0
      %308 = vmatprep.subr.mxu0 0.0
      %309 = vmatpush1.msra.mxu0 0.0
      %310 = vmatprep.subr.mxu0 0.0
      %311 = vmatpush1.msra.mxu0 0.0
      %312 = vmatprep.subr.mxu0 0.0
      %313 = vmatpush1.msra.mxu0 0.0
      %314 = vmatprep.subr.mxu0 0.0
      %315 = vmatpush1.msra.mxu0 0.0
      %316 = vmatprep.subr.mxu0 0.0
      %317 = vmatpush1.msra.mxu0 0.0
      %318 = vmatprep.subr.mxu0 0.0
      %319 = vmatpush1.msra.mxu0 0.0
      %320 = vmatprep.subr.mxu0 0.0
      %321 = vmatpush1.msra.mxu0 0.0
      %322 = vmatprep.subr.mxu0 0.0
      %323 = vmatpush1.msra.mxu0 0.0
      %324 = vmatprep.subr.mxu0 0.0
      %325 = vmatpush1.msra.mxu0 0.0
      %326 = vmatprep.subr.mxu0 0.0
      %327 = vmatpush1.msra.mxu0 0.0
      %328 = vmatprep.subr.mxu0 0.0
      %329 = vmatpush1.msra.mxu0 0.0
      %330 = vmatprep.subr.mxu0 0.0
      %331 = vmatpush1.msra.mxu0 0.0
      %332 = vmatprep.subr.mxu0 0.0
      %333 = vmatpush1.msra.mxu0 0.0
      %334 = vmatprep.subr.mxu0 0.0
      %335 = vmatpush1.msra.mxu0 0.0
      %336 = vmatprep.subr.mxu0 0.0
      %337 = vmatpush1.msra.mxu0 0.0
      %338 = vmatprep.subr.mxu0 0.0
      %339 = vmatpush1.msra.mxu0 0.0
      %340 = vmatprep.subr.mxu0 0.0
      %341 = vmatpush1.msra.mxu0 0.0
      %342 = vmatprep.subr.mxu0 0.0
      %343 = vmatpush1.msra.mxu0 0.0
      %344 = vmatprep.subr.mxu0 0.0
      %345 = vmatpush1.msra.mxu0 0.0
      %346 = vmatprep.subr.mxu0 0.0
      %347 = vmatpush1.msra.mxu0 0.0
      %348 = vmatprep.subr.mxu0 0.0
      %349 = vmatpush1.msra.mxu0 0.0
      %350 = vmatprep.subr.mxu0 0.0
      %351 = vmatpush1.msra.mxu0 0.0
      %352 = vmatprep.subr.mxu0 0.0
      %353 = vmatpush1.msra.mxu0 0.0
      %354 = vmatprep.subr.mxu0 0.0
      %355 = vmatpush1.msra.mxu0 0.0
      %356 = vmatprep.mubr.f32.mxu0 0.0
      %357 = vmatmul.mubr.f32.gmra.mrb[0].mxu0 %v290
      %v358 = vpop.f32.mrb[0].mxu0
      %v359 = vadd.f32 0.0, %v358
      %v360 = vpop.f32.mrb[0].mxu0
      %361 = vdwg.mxu0
      %362 = vst [vmem:[#allocation11] sm:$0x3] %v359
    $region37: #{tpu_custom_call.1} parent=1 // pred_fallthru
      _
    // Predicated region
    $region38: #{tpu_custom_call.1} parent=1 // pred_check
      _
    $region39: #{tpu_custom_call.1} parent=1 // pred_check_branch
      %364 = sbr.rel (0) target = $region41
    $region40: #{tpu_custom_call.1} parent=1 // pred_region
      %s366 = ssub.s32 32, 32
      %367 = vsyncadd [#allocation7], %s366
      %s369 = sshll.u32 [#allocation11], 4
      %s370 = int_to_ptr.vmem [resolvable:$true] %s369
      %372 = dma.vmem_to_hbm [thread:$0]  %s370, 32, %s4, [#allocation7]
    $region41: #{tpu_custom_call.1} parent=1 // pred_fallthru
      _
    // Predicated region
    $region42: #{tpu_custom_call.1} parent=1 // pred_check
      _
    $region43: #{tpu_custom_call.1} parent=1 // pred_check_branch
      %374 = sbr.rel (0) target = $region45
    $region44: #{tpu_custom_call.1} parent=1 // pred_region
      %375 = dma.done [#allocation7], 32
    $region45: #{tpu_custom_call.1} parent=1 // pred_fallthru
      _
    %376 = vsyncpa [#allocation6], 1
    %377 = vsyncpa [#allocation9], 1
    %378 = vsyncpa [#allocation7], 1

</llo_original>
